<compile_context>
chip_gen: v7x
topology: tpu7x:2x2x1
jax: 0.10.0
libtpu: 0.0.40
codegen_flags: <defaults>
</compile_context>

<pallas_src>
import jax
import jax.numpy as jnp
from jax.experimental import pallas as pl
from jax.experimental.pallas import tpu as pltpu


def se_block_kernel(x_ref, w1t_ref, b1_ref, w2t_ref, b2_ref, o_ref):
    # x block: (Bn, C, L); params are whole, lane-major.
    x = x_ref[...]                                     # (Bn, C, L)
    # Squeeze: global average pool over length -> lane-major (Bn, C).
    # Accumulate in f32 regardless of input dtype (bf16 drift guard).
    pooled = jnp.mean(x.astype(jnp.float32), axis=2)   # (Bn, C) f32
    # Excite: Conv1d(C -> Cr, k=1) on the pooled vector == pooled @ W1^T + b1.
    h = jnp.dot(pooled, w1t_ref[...],
                preferred_element_type=jnp.float32) + b1_ref[...]   # (Bn, Cr)
    h = jnp.maximum(h, 0.0)                            # ReLU
    # Conv1d(Cr -> C, k=1) == h @ W2^T + b2.
    s = jnp.dot(h, w2t_ref[...],
                preferred_element_type=jnp.float32) + b2_ref[...]   # (Bn, C)
    s = jax.nn.sigmoid(s)                              # Sigmoid gate
    # Scale: broadcast gate over L and multiply the input slab (lane-dense store).
    # (Gate relayout lane->sublane is XLU work hidden under the DMA shadow at
    #  these C; revisit if C grows into the hundreds.)
    o_ref[...] = x * s[:, :, None].astype(x.dtype)     # (Bn, C, L)


def _tpu_generation_budget():
    """Derive (num_tensorcores, vmem_limit_bytes, target_tile_bytes) from the
    actual chip generation instead of assuming v5e defaults."""
    vmem_phys = None
    kind = ""
    try:
        vmem_phys = int(pltpu.get_tpu_info().vmem_capacity_bytes)
    except Exception:
        vmem_phys = None
    try:
        kind = jax.devices()[0].device_kind.lower()
    except Exception:
        kind = ""
    is_v7x_class = (vmem_phys is not None and vmem_phys <= (64 << 20)) or ("v7" in kind)
    if is_v7x_class:
        # v7x: 64 MiB VMEM per TensorCore, 2 TCs/chip, 3.2 TB/s HBM.
        # Keep 2x(in)+2x(out) buffering around ~26 MiB -> double-buffering intact.
        return 2, 26 << 20, 6 << 20
    # v5e / v6e: 128 MiB physical VMEM, single TensorCore.
    return 1, 64 << 20, 8 << 20


_TINY_TOTAL_BYTES = 2 << 20        # below this, one grid step is strictly best
_MIN_SPLIT_TILE_BYTES = 1 << 20    # never shrink tiles below ~1 MiB just for steps


def _choose_batch_tile(n, c, l, itemsize, *, budget_bytes, target_tile_bytes,
                       num_cores):
    """Pick Bn: big enough to approach the HBM roofline, small enough that
    2x(in)+2x(out) double-buffered tiles fit the scoped VMEM budget, dividing N
    exactly, and leaving >= 2 grid steps per TensorCore when that doesn't make
    the tiles pointlessly small."""
    per_item = c * l * itemsize
    total = n * per_item

    # Leave ~25% headroom for params / compiler-internal scratch.
    usable = (budget_bytes * 3) // 4
    max_bn_vmem = max(1, usable // (4 * per_item))

    # Tiny problems (like the demo): whole array, one grid step.
    if total <= _TINY_TOTAL_BYTES and n <= max_bn_vmem:
        return n

    max_bn_target = max(1, target_tile_bytes // per_item)
    bn_cap = int(min(max_bn_vmem, max_bn_target, n))

    # Pipelining / megacore: aim for >= 2 steps per TensorCore.  On single-TC
    # parts only split if the resulting tile stays >= ~1 MiB; on v7x always
    # split (an idle TensorCore halves throughput).
    min_steps = 2 * num_cores
    if n >= min_steps:
        bn_for_steps = max(1, n // min_steps)
        if num_cores > 1 or bn_for_steps * per_item >= _MIN_SPLIT_TILE_BYTES:
            bn_cap = min(bn_cap, bn_for_steps)

    bn_cap = max(1, bn_cap)
    for bn in range(bn_cap, 0, -1):                    # largest divisor of N
        if n % bn == 0:
            return bn
    return 1


def se_block(x, w1, b1, w2, b2, *, bn=None, donate_x=False):
    """x: (N, C, L); w1: (Cr, C); b1: (Cr, 1); w2: (C, Cr); b2: (C, 1).

    Matches PyTorch SEBlock.forward:
        x * sigmoid(W2 @ relu(W1 @ mean_L(x) + b1) + b2).
    """
    N, C, L = x.shape
    Cr = w1.shape[0]
    itemsize = jnp.dtype(x.dtype).itemsize

    num_cores, vmem_limit_bytes, target_tile_bytes = _tpu_generation_budget()
    if bn is None:
        bn = _choose_batch_tile(N, C, L, itemsize,
                                budget_bytes=vmem_limit_bytes,
                                target_tile_bytes=target_tile_bytes,
                                num_cores=num_cores)
    assert N % bn == 0
    grid = (N // bn,)

    # Lane-major parameter layout (host-side, one-time):
    w1t = jnp.transpose(w1)          # (C, Cr)
    w2t = jnp.transpose(w2)          # (Cr, C)
    b1r = jnp.reshape(b1, (1, Cr))   # (1, Cr)
    b2r = jnp.reshape(b2, (1, C))    # (1, C)

    param_bytes = (w1t.size + w2t.size + b1r.size + b2r.size) * itemsize
    cost = pl.CostEstimate(
        flops=2 * N * C * Cr * 2      # two tiny GEMMs
              + 2 * N * C * L,        # gate multiply (+ pooling adds)
        transcendentals=N * C,        # sigmoid
        bytes_accessed=2 * N * C * L * itemsize + param_bytes,
    )

    extra_kwargs = {}
    if donate_x:
        # Caller no longer needs x: halve peak HBM footprint / skip an output alloc.
        extra_kwargs["input_output_aliases"] = {0: 0}

    return pl.pallas_call(
        se_block_kernel,
        out_shape=jax.ShapeDtypeStruct((N, C, L), x.dtype),
        grid_spec=pltpu.PrefetchScalarGridSpec(
            num_scalar_prefetch=0,
            grid=grid,
            in_specs=[
                pl.BlockSpec((bn, C, L), lambda i: (i, 0, 0)),   # x, Bn items/step
                pl.BlockSpec((C, Cr), lambda i: (0, 0)),         # W1^T (whole)
                pl.BlockSpec((1, Cr), lambda i: (0, 0)),         # b1 row vector
                pl.BlockSpec((Cr, C), lambda i: (0, 0)),         # W2^T (whole)
                pl.BlockSpec((1, C), lambda i: (0, 0)),          # b2 row vector
            ],
            out_specs=pl.BlockSpec((bn, C, L), lambda i: (i, 0, 0)),
        ),
        compiler_params=pltpu.CompilerParams(
            dimension_semantics=("parallel",),
            vmem_limit_bytes=vmem_limit_bytes,
        ),
        cost_estimate=cost,
        **extra_kwargs,
    )(x, w1t, b1r, w2t, b2r)


def se_block_ref(x, w1, b1, w2, b2):
    """Pure-JAX reference (mirrors the PyTorch forward)."""
    pooled = jnp.mean(x, axis=2, keepdims=True)                  # (N, C, 1)
    h = jnp.einsum("oc,ncl->nol", w1, pooled) + b1[None]         # (N, Cr, 1)
    h = jnp.maximum(h, 0.0)
    s = jnp.einsum("oc,ncl->nol", w2, h) + b2[None]              # (N, C, 1)
    s = jax.nn.sigmoid(s)
    return x * s


if __name__ == "__main__":
    # Small shapes consistent with SEBlock(n_channels=16, se_ratio=4).
    N, C, L = 8, 16, 128
    se_ratio = 4
    Cr = C // se_ratio

    key = jax.random.PRNGKey(0)
    kx, k1, k2, k3, k4 = jax.random.split(key, 5)

    x = jax.random.normal(kx, (N, C, L), dtype=jnp.float32)
    # Deterministic synthetic parameters (Conv1d k=1 weights squeezed to 2-D).
    w1 = jax.random.normal(k1, (Cr, C), dtype=jnp.float32) * (1.0 / jnp.sqrt(C))
    b1 = jax.random.normal(k2, (Cr, 1), dtype=jnp.float32) * 0.1
    w2 = jax.random.normal(k3, (C, Cr), dtype=jnp.float32) * (1.0 / jnp.sqrt(Cr))
    b2 = jax.random.normal(k4, (C, 1), dtype=jnp.float32) * 0.1

    out = se_block(x, w1, b1, w2, b2)
    out = jax.block_until_ready(out)

    ref = se_block_ref(x, w1, b1, w2, b2)
    assert out.shape == (N, C, L)
    assert jnp.allclose(out, ref, atol=1e-5, rtol=1e-5), "mismatch vs reference"

    print("KERNEL_OK")
</pallas_src>

<mosaic_0001>
module attributes {stable_mosaic.version = 11 : i64} {
  func.func @se_block_kernel(%arg0: i32, %arg1: memref<8x16x128xf32, #tpu.memory_space<vmem>>, %arg2: memref<16x4xf32, #tpu.memory_space<vmem>>, %arg3: memref<1x4xf32, #tpu.memory_space<vmem>>, %arg4: memref<4x16xf32, #tpu.memory_space<vmem>>, %arg5: memref<1x16xf32, #tpu.memory_space<vmem>>, %arg6: memref<8x16x128xf32, #tpu.memory_space<vmem>>) attributes {dimension_semantics = [#tpu.dimension_semantics<parallel>], iteration_bounds = array<i64: 1>, scalar_prefetch = 0 : i64, scratch_operands = 0 : i64, tpu.core_type = #tpu.core_type<tc>, window_params = [{transform_indices = @transform_0, window_bounds = array<i64: 8, 16, 128>}, {pipeline_mode = #tpu.pipeline_mode<synchronous>, transform_indices = @transform_1, window_bounds = array<i64: 16, 4>}, {pipeline_mode = #tpu.pipeline_mode<synchronous>, transform_indices = @transform_2, window_bounds = array<i64: 1, 4>}, {pipeline_mode = #tpu.pipeline_mode<synchronous>, transform_indices = @transform_3, window_bounds = array<i64: 4, 16>}, {pipeline_mode = #tpu.pipeline_mode<synchronous>, transform_indices = @transform_4, window_bounds = array<i64: 1, 16>}, {transform_indices = @transform_5, window_bounds = array<i64: 8, 16, 128>}]} {
    %c0 = arith.constant 0 : index
    %c0_0 = arith.constant 0 : index
    %c0_1 = arith.constant 0 : index
    %0 = vector.load %arg1[%c0, %c0_0, %c0_1] : memref<8x16x128xf32, #tpu.memory_space<vmem>>, vector<8x16x128xf32>
    %cst = arith.constant dense<0.000000e+00> : vector<8x16xf32>
    %1 = vector.multi_reduction <add>, %0, %cst [2] : vector<8x16x128xf32> to vector<8x16xf32>
    %cst_2 = arith.constant 1.280000e+02 : f32
    %2 = vector.broadcast %cst_2 : f32 to vector<8x16xf32>
    %3 = arith.divf %1, %2 : vector<8x16xf32>
    %c0_3 = arith.constant 0 : index
    %c0_4 = arith.constant 0 : index
    %4 = vector.load %arg2[%c0_3, %c0_4] : memref<16x4xf32, #tpu.memory_space<vmem>>, vector<16x4xf32>
    %cst_5 = arith.constant dense<0.000000e+00> : vector<8x4xf32>
    %5 = tpu.matmul %3, %4, %cst_5 {dimension_numbers = #tpu.dot_dimension_numbers<[1], [0], [0], [1], [0, 0, 1, 1], [], []>} : vector<8x16xf32>, vector<16x4xf32>, vector<8x4xf32> -> vector<8x4xf32>
    %c0_6 = arith.constant 0 : index
    %c0_7 = arith.constant 0 : index
    %6 = vector.load %arg3[%c0_6, %c0_7] : memref<1x4xf32, #tpu.memory_space<vmem>>, vector<1x4xf32>
    %7 = vector.broadcast %6 : vector<1x4xf32> to vector<8x4xf32>
    %8 = arith.addf %5, %7 : vector<8x4xf32>
    %cst_8 = arith.constant 0.000000e+00 : f32
    %9 = vector.broadcast %cst_8 : f32 to vector<8x4xf32>
    %10 = arith.maximumf %8, %9 : vector<8x4xf32>
    %c0_9 = arith.constant 0 : index
    %c0_10 = arith.constant 0 : index
    %11 = vector.load %arg4[%c0_9, %c0_10] : memref<4x16xf32, #tpu.memory_space<vmem>>, vector<4x16xf32>
    %cst_11 = arith.constant dense<0.000000e+00> : vector<8x16xf32>
    %12 = tpu.matmul %10, %11, %cst_11 {dimension_numbers = #tpu.dot_dimension_numbers<[1], [0], [0], [1], [0, 0, 1, 1], [], []>} : vector<8x4xf32>, vector<4x16xf32>, vector<8x16xf32> -> vector<8x16xf32>
    %c0_12 = arith.constant 0 : index
    %c0_13 = arith.constant 0 : index
    %13 = vector.load %arg5[%c0_12, %c0_13] : memref<1x16xf32, #tpu.memory_space<vmem>>, vector<1x16xf32>
    %14 = vector.broadcast %13 : vector<1x16xf32> to vector<8x16xf32>
    %15 = arith.addf %12, %14 : vector<8x16xf32>
    %16 = arith.negf %15 : vector<8x16xf32>
    %17 = math.exp %16 : vector<8x16xf32>
    %cst_14 = arith.constant 1.000000e+00 : f32
    %18 = vector.broadcast %cst_14 : f32 to vector<8x16xf32>
    %19 = arith.addf %18, %17 : vector<8x16xf32>
    %20 = arith.divf %18, %19 : vector<8x16xf32>
    %21 = vector.shape_cast %20 : vector<8x16xf32> to vector<8x16x1xf32>
    %22 = vector.broadcast %21 : vector<8x16x1xf32> to vector<8x16x128xf32>
    %23 = arith.mulf %0, %22 : vector<8x16x128xf32>
    %c0_15 = arith.constant 0 : index
    %c0_16 = arith.constant 0 : index
    %c0_17 = arith.constant 0 : index
    %24 = vector.load %arg6[%c0_15, %c0_16, %c0_17] : memref<8x16x128xf32, #tpu.memory_space<vmem>>, vector<8x16x128xf32>
    tpu.vector_store %arg6[%c0_15, %c0_16, %c0_17], %23 {strides = array<i32>} : memref<8x16x128xf32, #tpu.memory_space<vmem>>, vector<8x16x128xf32>,
    return
  }
  func.func @transform_0(%arg0: i32) -> (i32, i32, i32) {
    %c0_i32 = arith.constant 0 : i32
    %c0_i32_0 = arith.constant 0 : i32
    %c0_i32_1 = arith.constant 0 : i32
    return %arg0, %c0_i32, %c0_i32_0 : i32, i32, i32
  }
  func.func @transform_1(%arg0: i32) -> (i32, i32) {
    %c0_i32 = arith.constant 0 : i32
    %c0_i32_0 = arith.constant 0 : i32
    %c0_i32_1 = arith.constant 0 : i32
    return %c0_i32, %c0_i32_0 : i32, i32
  }
  func.func @transform_2(%arg0: i32) -> (i32, i32) {
    %c0_i32 = arith.constant 0 : i32
    %c0_i32_0 = arith.constant 0 : i32
    %c0_i32_1 = arith.constant 0 : i32
    return %c0_i32, %c0_i32_0 : i32, i32
  }
  func.func @transform_3(%arg0: i32) -> (i32, i32) {
    %c0_i32 = arith.constant 0 : i32
    %c0_i32_0 = arith.constant 0 : i32
    %c0_i32_1 = arith.constant 0 : i32
    return %c0_i32, %c0_i32_0 : i32, i32
  }
  func.func @transform_4(%arg0: i32) -> (i32, i32) {
    %c0_i32 = arith.constant 0 : i32
    %c0_i32_0 = arith.constant 0 : i32
    %c0_i32_1 = arith.constant 0 : i32
    return %c0_i32, %c0_i32_0 : i32, i32
  }
  func.func @transform_5(%arg0: i32) -> (i32, i32, i32) {
    %c0_i32 = arith.constant 0 : i32
    %c0_i32_0 = arith.constant 0 : i32
    %c0_i32_1 = arith.constant 0 : i32
    return %arg0, %c0_i32, %c0_i32_0 : i32, i32, i32
  }
}

</mosaic_0001>

<llo_original>
// kernel: tpu_custom_call.1
$region0: #{tpu_custom_call.1}
  #allocation0 [shape = 'u32[]', space=smem, size = 0x4, offset = 0x4, fixed_abs, tag = 'smem constant byte address 0x4 - core index']
  #allocation1 [shape = 'u32[144,128]{1,0:T(1,128)}', space=vmem, size = 0x12000, scoped, tag = 'internal scratch']
  %s0 = inlined_call_operand.hbm [shape: f32[8,16,128], index: 0, kind: input, shape index: {}]
  %s1 = inlined_call_operand.hbm [shape: f32[16,4], index: 1, kind: input, shape index: {}]
  %s2 = inlined_call_operand.hbm [shape: f32[1,4], index: 2, kind: input, shape index: {}]
  %s3 = inlined_call_operand.hbm [shape: f32[4,16], index: 3, kind: input, shape index: {}]
  %s4 = inlined_call_operand.hbm [shape: f32[1,16], index: 4, kind: input, shape index: {}]
  %s5 = inlined_call_operand.hbm [shape: f32[8,16,128], index: 5, kind: output, shape index: {}]
  %s6 = sld [smem:[#allocation0]]
  $region50: #{tpu_custom_call.1} parent=0
    _
  %s8 = ssub.s32 1, %s6
  %s9 = scalar_select 0, %s8, %s6
  $region1: #{tpu_custom_call.1} parent=0
    #allocation2 [shape = 'u8[65536]{0}', space=vmem, size = 0x10000, scoped, tag = 'input window, operand 0, single buffered']
    #allocation3 [shape = 's32[1]{0}', space=sflag, size = 0x4, scoped, tag = 'scoped memory for tpu_custom_call.1']
    #allocation4 [shape = 's32[1]{0}', space=sflag, size = 0x4, scoped, tag = 'scoped memory for tpu_custom_call.1']
    #allocation5 [shape = 'u8[8192]{0}', space=vmem, size = 0x2000, scoped, tag = 'input window, operand 1, single buffered']
    #allocation6 [shape = 's32[1]{0}', space=sflag, size = 0x4, scoped, tag = 'scoped memory for tpu_custom_call.1']
    #allocation7 [shape = 'u8[512]{0}', space=vmem, size = 0x400, scoped, tag = 'input window, operand 2, single buffered']
    #allocation8 [shape = 'u8[2048]{0}', space=vmem, size = 0x800, scoped, tag = 'input window, operand 3, single buffered']
    #allocation9 [shape = 's32[1]{0}', space=sflag, size = 0x4, scoped, tag = 'scoped memory for tpu_custom_call.1']
    #allocation10 [shape = 'u8[512]{0}', space=vmem, size = 0x400, scoped, tag = 'input window, operand 4, single buffered']
    #allocation11 [shape = 'u8[65536]{0}', space=vmem, size = 0x10000, scoped, tag = 'output window, operand 0, single buffered']
    %10 = vsyncpa [#allocation3], 0
    %11 = vsyncpa [#allocation6], 0
    %12 = vsyncpa [#allocation9], 0
    %13 = vsyncpa [#allocation4], 0
    // Predicated region
    $region2: #{tpu_custom_call.1} parent=1 // pred_check
      _
    $region3: #{tpu_custom_call.1} parent=1 // pred_check_branch
      %15 = sbr.rel (0) target = $region5
    $region4: #{tpu_custom_call.1} parent=1 // pred_region
      %s17 = ssub.s32 2048, 2048
      %18 = vsyncadd [#allocation3], %s17
      %s19 = sshll.u32 [#allocation2], 4
      %s20 = int_to_ptr.vmem [resolvable:$true] %s19
      %25 = dma.hbm_to_vmem [thread:$0]  %s0, 2048, %s20, [#allocation3], 128, 128, 8
    $region5: #{tpu_custom_call.1} parent=1 // pred_fallthru
      _
    // Predicated region
    $region6: #{tpu_custom_call.1} parent=1 // pred_check
      _
    $region7: #{tpu_custom_call.1} parent=1 // pred_check_branch
      %27 = sbr.rel (0) target = $region9
    $region8: #{tpu_custom_call.1} parent=1 // pred_region
      %s29 = ssub.s32 256, 256
      %30 = vsyncadd [#allocation6], %s29
      %s31 = sshll.u32 [#allocation5], 4
      %s32 = int_to_ptr.vmem [resolvable:$true] %s31
      %37 = dma.hbm_to_vmem [thread:$0]  %s1, 256, %s32, [#allocation6], 128, 128, 8
    $region9: #{tpu_custom_call.1} parent=1 // pred_fallthru
      _
    // Predicated region
    $region10: #{tpu_custom_call.1} parent=1 // pred_check
      _
    $region11: #{tpu_custom_call.1} parent=1 // pred_check_branch
      %39 = sbr.rel (0) target = $region13
    $region12: #{tpu_custom_call.1} parent=1 // pred_region
      %s41 = ssub.s32 16, 16
      %42 = vsyncadd [#allocation6], %s41
      %s44 = sshll.u32 [#allocation7], 4
      %s45 = int_to_ptr.vmem [resolvable:$true] %s44
      %47 = dma.hbm_to_vmem [thread:$0]  %s2, 16, %s45, [#allocation6]
    $region13: #{tpu_custom_call.1} parent=1 // pred_fallthru
      _
    // Predicated region
    $region14: #{tpu_custom_call.1} parent=1 // pred_check
      _
    $region15: #{tpu_custom_call.1} parent=1 // pred_check_branch
      %49 = sbr.rel (0) target = $region17
    $region16: #{tpu_custom_call.1} parent=1 // pred_region
      %s51 = ssub.s32 64, 64
      %52 = vsyncadd [#allocation9], %s51
      %s54 = sshll.u32 [#allocation8], 4
      %s55 = int_to_ptr.vmem [resolvable:$true] %s54
      %57 = dma.hbm_to_vmem [thread:$0]  %s3, 64, %s55, [#allocation9]
    $region17: #{tpu_custom_call.1} parent=1 // pred_fallthru
      _
    // Predicated region
    $region18: #{tpu_custom_call.1} parent=1 // pred_check
      _
    $region19: #{tpu_custom_call.1} parent=1 // pred_check_branch
      %59 = sbr.rel (0) target = $region21
    $region20: #{tpu_custom_call.1} parent=1 // pred_region
      %s61 = ssub.s32 16, 16
      %62 = vsyncadd [#allocation9], %s61
      %s64 = sshll.u32 [#allocation10], 4
      %s65 = int_to_ptr.vmem [resolvable:$true] %s64
      %67 = dma.hbm_to_vmem [thread:$0]  %s4, 16, %s65, [#allocation9]
    $region21: #{tpu_custom_call.1} parent=1 // pred_fallthru
      _
    // Predicated region
    $region22: #{tpu_custom_call.1} parent=1 // pred_check
      _
    $region23: #{tpu_custom_call.1} parent=1 // pred_check_branch
      %69 = sbr.rel (0) target = $region25
    $region24: #{tpu_custom_call.1} parent=1 // pred_region
      %70 = dma.done [#allocation3], 2048
    $region25: #{tpu_custom_call.1} parent=1 // pred_fallthru
      _
    // Predicated region
    $region26: #{tpu_custom_call.1} parent=1 // pred_check
      _
    $region27: #{tpu_custom_call.1} parent=1 // pred_check_branch
      %72 = sbr.rel (0) target = $region29
    $region28: #{tpu_custom_call.1} parent=1 // pred_region
      %73 = dma.done [#allocation6], 256
    $region29: #{tpu_custom_call.1} parent=1 // pred_fallthru
      _
    // Predicated region
    $region30: #{tpu_custom_call.1} parent=1 // pred_check
      _
    $region31: #{tpu_custom_call.1} parent=1 // pred_check_branch
      %75 = sbr.rel (0) target = $region33
    $region32: #{tpu_custom_call.1} parent=1 // pred_region
      %76 = dma.done [#allocation6], 16
    $region33: #{tpu_custom_call.1} parent=1 // pred_fallthru
      _
    // Predicated region
    $region34: #{tpu_custom_call.1} parent=1 // pred_check
      _
    $region35: #{tpu_custom_call.1} parent=1 // pred_check_branch
      %78 = sbr.rel (0) target = $region37
    $region36: #{tpu_custom_call.1} parent=1 // pred_region
      %79 = dma.done [#allocation9], 64
    $region37: #{tpu_custom_call.1} parent=1 // pred_fallthru
      _
    // Predicated region
    $region38: #{tpu_custom_call.1} parent=1 // pred_check
      _
    $region39: #{tpu_custom_call.1} parent=1 // pred_check_branch
      %81 = sbr.rel (0) target = $region41
    $region40: #{tpu_custom_call.1} parent=1 // pred_region
      %82 = dma.done [#allocation9], 16
    $region41: #{tpu_custom_call.1} parent=1 // pred_fallthru
      _
    %v83 = vld [vmem:[#allocation2] sm:$0xff]
    %v84 = vld [vmem:[#allocation2 + $0x8] sm:$0xff]
    %v85 = vld [vmem:[#allocation2 + $0x10] sm:$0xff]
    %v86 = vld [vmem:[#allocation2 + $0x18] sm:$0xff]
    %v87 = vld [vmem:[#allocation2 + $0x20] sm:$0xff]
    %v88 = vld [vmem:[#allocation2 + $0x28] sm:$0xff]
    %v89 = vld [vmem:[#allocation2 + $0x30] sm:$0xff]
    %v90 = vld [vmem:[#allocation2 + $0x38] sm:$0xff]
    %v91 = vld [vmem:[#allocation2 + $0x40] sm:$0xff]
    %v92 = vld [vmem:[#allocation2 + $0x48] sm:$0xff]
    %v93 = vld [vmem:[#allocation2 + $0x50] sm:$0xff]
    %v94 = vld [vmem:[#allocation2 + $0x58] sm:$0xff]
    %v95 = vld [vmem:[#allocation2 + $0x60] sm:$0xff]
    %v96 = vld [vmem:[#allocation2 + $0x68] sm:$0xff]
    %v97 = vld [vmem:[#allocation2 + $0x70] sm:$0xff]
    %v98 = vld [vmem:[#allocation2 + $0x78] sm:$0xff]
    %99 = vadd.xlane.f32.xlu0 %v83
    %v100 = vpop.xlane.xlu0 %99
    %101 = vadd.xlane.f32.xlu0 %v84
    %v102 = vpop.xlane.xlu0 %101
    %103 = vadd.xlane.f32.xlu0 %v85
    %v104 = vpop.xlane.xlu0 %103
    %105 = vadd.xlane.f32.xlu0 %v86
    %v106 = vpop.xlane.xlu0 %105
    %107 = vadd.xlane.f32.xlu0 %v87
    %v108 = vpop.xlane.xlu0 %107
    %109 = vadd.xlane.f32.xlu0 %v88
    %v110 = vpop.xlane.xlu0 %109
    %111 = vadd.xlane.f32.xlu0 %v89
    %v112 = vpop.xlane.xlu0 %111
    %113 = vadd.xlane.f32.xlu0 %v90
    %v114 = vpop.xlane.xlu0 %113
    %115 = vadd.xlane.f32.xlu0 %v91
    %v116 = vpop.xlane.xlu0 %115
    %117 = vadd.xlane.f32.xlu0 %v92
    %v118 = vpop.xlane.xlu0 %117
    %119 = vadd.xlane.f32.xlu0 %v93
    %v120 = vpop.xlane.xlu0 %119
    %121 = vadd.xlane.f32.xlu0 %v94
    %v122 = vpop.xlane.xlu0 %121
    %123 = vadd.xlane.f32.xlu0 %v95
    %v124 = vpop.xlane.xlu0 %123
    %125 = vadd.xlane.f32.xlu0 %v96
    %v126 = vpop.xlane.xlu0 %125
    %127 = vadd.xlane.f32.xlu0 %v97
    %v128 = vpop.xlane.xlu0 %127
    %129 = vadd.xlane.f32.xlu0 %v98
    %v130 = vpop.xlane.xlu0 %129
    %v131 = vrcp.pop 128.0
    %v132 = vmul.f32 %v100, %v131
    %v133 = vmul.f32 %v102, %v131
    %v134 = vmul.f32 %v104, %v131
    %v135 = vmul.f32 %v106, %v131
    %v136 = vmul.f32 %v108, %v131
    %v137 = vmul.f32 %v110, %v131
    %v138 = vmul.f32 %v112, %v131
    %v139 = vmul.f32 %v114, %v131
    %v140 = vmul.f32 %v116, %v131
    %v141 = vmul.f32 %v118, %v131
    %v142 = vmul.f32 %v120, %v131
    %v143 = vmul.f32 %v122, %v131
    %v144 = vmul.f32 %v124, %v131
    %v145 = vmul.f32 %v126, %v131
    %v146 = vmul.f32 %v128, %v131
    %v147 = vmul.f32 %v130, %v131
    %v148 = vld [vmem:[#allocation5] sm:$0xff]
    %v149 = vld [vmem:[#allocation5 + $0x8] sm:$0xff]
    %v150 = vld [vmem:[#allocation7] sm:$0x1]
    %v152 = vlaneseq
    %v153 = vshrl.u32 %v152, 7
    %v154 = vsub.s32 0, %v153
    %v155 = vrot.slane %v150, %v154
    %v173 = vlaneseq
    %v174 = vand.u32 %v173, 127
    %v175 = vlaneseq
    %v176 = vshrl.u32 %v175, 7
    %v177 = vsub.s32 %v174, %v176
    %v178 = vrot.slane %v132, %v177
    %v179 = vadd.s32 %v174, 4294967288
    %v180 = vlaneseq
    %v181 = vshrl.u32 %v180, 7
    %v182 = vsub.s32 %v179, %v181
    %v183 = vrot.slane %v133, %v182
    %vm184 = vcmask 130112
    %v185 = vsel %vm184, %v183, %v178
    %v186 = vlaneseq
    %v187 = vshrl.u32 %v186, 7
    %v188 = vsub.s32 %v174, %v187
    %v189 = vrot.slane %v134, %v188
    %v190 = vlaneseq
    %v191 = vshrl.u32 %v190, 7
    %v192 = vsub.s32 %v179, %v191
    %v193 = vrot.slane %v135, %v192
    %v194 = vsel %vm184, %v193, %v189
    %v195 = vlaneseq
    %v196 = vshrl.u32 %v195, 7
    %v197 = vsub.s32 %v174, %v196
    %v198 = vrot.slane %v136, %v197
    %v199 = vlaneseq
    %v200 = vshrl.u32 %v199, 7
    %v201 = vsub.s32 %v179, %v200
    %v202 = vrot.slane %v137, %v201
    %v203 = vsel %vm184, %v202, %v198
    %v204 = vlaneseq
    %v205 = vshrl.u32 %v204, 7
    %v206 = vsub.s32 %v174, %v205
    %v207 = vrot.slane %v138, %v206
    %v208 = vlaneseq
    %v209 = vshrl.u32 %v208, 7
    %v210 = vsub.s32 %v179, %v209
    %v211 = vrot.slane %v139, %v210
    %v212 = vsel %vm184, %v211, %v207
    %v213 = vlaneseq
    %v214 = vshrl.u32 %v213, 7
    %v215 = vsub.s32 %v174, %v214
    %v216 = vrot.slane %v140, %v215
    %v217 = vlaneseq
    %v218 = vshrl.u32 %v217, 7
    %v219 = vsub.s32 %v179, %v218
    %v220 = vrot.slane %v141, %v219
    %v221 = vsel %vm184, %v220, %v216
    %v222 = vlaneseq
    %v223 = vshrl.u32 %v222, 7
    %v224 = vsub.s32 %v174, %v223
    %v225 = vrot.slane %v142, %v224
    %v226 = vlaneseq
    %v227 = vshrl.u32 %v226, 7
    %v228 = vsub.s32 %v179, %v227
    %v229 = vrot.slane %v143, %v228
    %v230 = vsel %vm184, %v229, %v225
    %v231 = vlaneseq
    %v232 = vshrl.u32 %v231, 7
    %v233 = vsub.s32 %v174, %v232
    %v234 = vrot.slane %v144, %v233
    %v235 = vlaneseq
    %v236 = vshrl.u32 %v235, 7
    %v237 = vsub.s32 %v179, %v236
    %v238 = vrot.slane %v145, %v237
    %v239 = vsel %vm184, %v238, %v234
    %v240 = vlaneseq
    %v241 = vshrl.u32 %v240, 7
    %v242 = vsub.s32 %v174, %v241
    %v243 = vrot.slane %v146, %v242
    %v244 = vlaneseq
    %v245 = vshrl.u32 %v244, 7
    %v246 = vsub.s32 %v179, %v245
    %v247 = vrot.slane %v147, %v246
    %v248 = vsel %vm184, %v247, %v243
    %vm249 = vcmask 1041409
    %v250 = vsel %vm249, %v194, %v185
    %vm251 = vcmask 1042434
    %v252 = vsel %vm251, %v203, %v250
    %vm253 = vcmask 1043459
    %v254 = vsel %vm253, %v212, %v252
    %vm255 = vcmask 1044484
    %v256 = vsel %vm255, %v221, %v254
    %vm257 = vcmask 1045509
    %v258 = vsel %vm257, %v230, %v256
    %vm259 = vcmask 1046534
    %v260 = vsel %vm259, %v239, %v258
    %vm261 = vcmask 1047559
    %v262 = vsel %vm261, %v248, %v260
    %vm263 = vcmask 130048
    %v264 = vsel %vm263, %v262, 0
    %266 = vmatprep.subr.mxu0 0.0
    %267 = vmatpush1.msra.mxu0 %v148
    %268 = vmatprep.subr.mxu0 0.0
    %269 = vmatpush1.msra.mxu0 %v149
    %270 = vmatprep.subr.mxu0 0.0
    %271 = vmatpush1.msra.mxu0 0.0
    %272 = vmatprep.subr.mxu0 0.0
    %273 = vmatpush1.msra.mxu0 0.0
    %274 = vmatprep.subr.mxu0 0.0
    %275 = vmatpush1.msra.mxu0 0.0
    %276 = vmatprep.subr.mxu0 0.0
    %277 = vmatpush1.msra.mxu0 0.0
    %278 = vmatprep.subr.mxu0 0.0
    %279 = vmatpush1.msra.mxu0 0.0
    %280 = vmatprep.subr.mxu0 0.0
    %281 = vmatpush1.msra.mxu0 0.0
    %282 = vmatprep.subr.mxu0 0.0
    %283 = vmatpush1.msra.mxu0 0.0
    %284 = vmatprep.subr.mxu0 0.0
    %285 = vmatpush1.msra.mxu0 0.0
    %286 = vmatprep.subr.mxu0 0.0
    %287 = vmatpush1.msra.mxu0 0.0
    %288 = vmatprep.subr.mxu0 0.0
    %289 = vmatpush1.msra.mxu0 0.0
    %290 = vmatprep.subr.mxu0 0.0
    %291 = vmatpush1.msra.mxu0 0.0
    %292 = vmatprep.subr.mxu0 0.0
    %293 = vmatpush1.msra.mxu0 0.0
    %294 = vmatprep.subr.mxu0 0.0
    %295 = vmatpush1.msra.mxu0 0.0
    %296 = vmatprep.subr.mxu0 0.0
    %297 = vmatpush1.msra.mxu0 0.0
    %298 = vmatprep.subr.mxu0 0.0
    %299 = vmatpush1.msra.mxu0 0.0
    %300 = vmatprep.subr.mxu0 0.0
    %301 = vmatpush1.msra.mxu0 0.0
    %302 = vmatprep.subr.mxu0 0.0
    %303 = vmatpush1.msra.mxu0 0.0
    %304 = vmatprep.subr.mxu0 0.0
    %305 = vmatpush1.msra.mxu0 0.0
    %306 = vmatprep.subr.mxu0 0.0
    %307 = vmatpush1.msra.mxu0 0.0
    %308 = vmatprep.subr.mxu0 0.0
    %309 = vmatpush1.msra.mxu0 0.0
    %310 = vmatprep.subr.mxu0 0.0
    %311 = vmatpush1.msra.mxu0 0.0
    %312 = vmatprep.subr.mxu0 0.0
    %313 = vmatpush1.msra.mxu0 0.0
    %314 = vmatprep.subr.mxu0 0.0
    %315 = vmatpush1.msra.mxu0 0.0
    %316 = vmatprep.subr.mxu0 0.0
    %317 = vmatpush1.msra.mxu0 0.0
    %318 = vmatprep.subr.mxu0 0.0
    %319 = vmatpush1.msra.mxu0 0.0
    %320 = vmatprep.subr.mxu0 0.0
    %321 = vmatpush1.msra.mxu0 0.0
    %322 = vmatprep.subr.mxu0 0.0
    %323 = vmatpush1.msra.mxu0 0.0
    %324 = vmatprep.subr.mxu0 0.0
    %325 = vmatpush1.msra.mxu0 0.0
    %326 = vmatprep.subr.mxu0 0.0
    %327 = vmatpush1.msra.mxu0 0.0
    %328 = vmatprep.subr.mxu0 0.0
    %329 = vmatpush1.msra.mxu0 0.0
    %330 = vmatprep.mubr.f32.mxu0 0.0
    %331 = vmatmul.mubr.f32.gmra.mrb[0].mxu0 %v264
    %v332 = vpop.f32.mrb[0].mxu0
    %v333 = vadd.f32 %v155, %v332
    %v334 = vpop.f32.mrb[0].mxu0
    %335 = vdwg.mxu0
    %v336 = vmax.f32 %v333, 0.0
    %v337 = vld [vmem:[#allocation8] sm:$0xf]
    %v338 = vld [vmem:[#allocation10] sm:$0x1]
    %v340 = vlaneseq
    %v341 = vshrl.u32 %v340, 7
    %v342 = vsub.s32 0, %v341
    %v343 = vrot.slane %v338, %v342
    %vm345 = vcmask 31744
    %v347 = vsel %vm345, %v336, 0
    %vm349 = vcmask 1043456
    %v351 = vsel %vm349, %v337, 0
    %353 = vmatprep.subr.mxu0 0.0
    %354 = vmatpush1.msra.mxu0 %v351
    %355 = vmatprep.subr.mxu0 0.0
    %356 = vmatpush1.msra.mxu0 0.0
    %357 = vmatprep.subr.mxu0 0.0
    %358 = vmatpush1.msra.mxu0 0.0
    %359 = vmatprep.subr.mxu0 0.0
    %360 = vmatpush1.msra.mxu0 0.0
    %361 = vmatprep.subr.mxu0 0.0
    %362 = vmatpush1.msra.mxu0 0.0
    %363 = vmatprep.subr.mxu0 0.0
    %364 = vmatpush1.msra.mxu0 0.0
    %365 = vmatprep.subr.mxu0 0.0
    %366 = vmatpush1.msra.mxu0 0.0
    %367 = vmatprep.subr.mxu0 0.0
    %368 = vmatpush1.msra.mxu0 0.0
    %369 = vmatprep.subr.mxu0 0.0
    %370 = vmatpush1.msra.mxu0 0.0
    %371 = vmatprep.subr.mxu0 0.0
    %372 = vmatpush1.msra.mxu0 0.0
    %373 = vmatprep.subr.mxu0 0.0
    %374 = vmatpush1.msra.mxu0 0.0
    %375 = vmatprep.subr.mxu0 0.0
    %376 = vmatpush1.msra.mxu0 0.0
    %377 = vmatprep.subr.mxu0 0.0
    %378 = vmatpush1.msra.mxu0 0.0
    %379 = vmatprep.subr.mxu0 0.0
    %380 = vmatpush1.msra.mxu0 0.0
    %381 = vmatprep.subr.mxu0 0.0
    %382 = vmatpush1.msra.mxu0 0.0
    %383 = vmatprep.subr.mxu0 0.0
    %384 = vmatpush1.msra.mxu0 0.0
    %385 = vmatprep.subr.mxu0 0.0
    %386 = vmatpush1.msra.mxu0 0.0
    %387 = vmatprep.subr.mxu0 0.0
    %388 = vmatpush1.msra.mxu0 0.0
    %389 = vmatprep.subr.mxu0 0.0
    %390 = vmatpush1.msra.mxu0 0.0
    %391 = vmatprep.subr.mxu0 0.0
    %392 = vmatpush1.msra.mxu0 0.0
    %393 = vmatprep.subr.mxu0 0.0
    %394 = vmatpush1.msra.mxu0 0.0
    %395 = vmatprep.subr.mxu0 0.0
    %396 = vmatpush1.msra.mxu0 0.0
    %397 = vmatprep.subr.mxu0 0.0
    %398 = vmatpush1.msra.mxu0 0.0
    %399 = vmatprep.subr.mxu0 0.0
    %400 = vmatpush1.msra.mxu0 0.0
    %401 = vmatprep.subr.mxu0 0.0
    %402 = vmatpush1.msra.mxu0 0.0
    %403 = vmatprep.subr.mxu0 0.0
    %404 = vmatpush1.msra.mxu0 0.0
    %405 = vmatprep.subr.mxu0 0.0
    %406 = vmatpush1.msra.mxu0 0.0
    %407 = vmatprep.subr.mxu0 0.0
    %408 = vmatpush1.msra.mxu0 0.0
    %409 = vmatprep.subr.mxu0 0.0
    %410 = vmatpush1.msra.mxu0 0.0
    %411 = vmatprep.subr.mxu0 0.0
    %412 = vmatpush1.msra.mxu0 0.0
    %413 = vmatprep.subr.mxu0 0.0
    %414 = vmatpush1.msra.mxu0 0.0
    %415 = vmatprep.subr.mxu0 0.0
    %416 = vmatpush1.msra.mxu0 0.0
    %417 = vmatprep.mubr.f32.mxu0 0.0
    %418 = vmatmul.mubr.f32.gmra.mrb[0].mxu0 %v347
    %v419 = vpop.f32.mrb[0].mxu0
    %v420 = vadd.f32 %v343, %v419
    %v421 = vpop.f32.mrb[0].mxu0
    %422 = vdwg.mxu0
    %v423 = vxor.u32 %v420, 2147483648
    %v424 = vmul.f32 %v423, 1.442695
    %v425 = vpow.pop %v424
    %v426 = vadd.f32 %v425, 1.0
    %v427 = vrcp.pop %v426
    %v428 = vmul.f32 1.0, %v427
    %v429 = vlaneseq
    %v430 = vshrl.u32 %v429, 7
    %v431 = vsub.s32 0, %v430
    %v432 = vrot.slane %v428, %v431
    %434 = vbcast.lane.b32.xlu0 %v432, 256
    %v435 = vpop.permute.xlu0 %434
    %s437 = sor.u32 256, 8
    %438 = vbcast.lane.b32.xlu0 %v432, %s437
    %v439 = vpop.permute.xlu0 %438
    %v440 = vlaneseq
    %v441 = vshrl.u32 %v440, 7
    %v442 = vsub.s32 1, %v441
    %v443 = vrot.slane %v428, %v442
    %445 = vbcast.lane.b32.xlu0 %v443, 256
    %v446 = vpop.permute.xlu0 %445
    %s448 = sor.u32 256, 8
    %449 = vbcast.lane.b32.xlu0 %v443, %s448
    %v450 = vpop.permute.xlu0 %449
    %v451 = vlaneseq
    %v452 = vshrl.u32 %v451, 7
    %v453 = vsub.s32 2, %v452
    %v454 = vrot.slane %v428, %v453
    %456 = vbcast.lane.b32.xlu0 %v454, 256
    %v457 = vpop.permute.xlu0 %456
    %s459 = sor.u32 256, 8
    %460 = vbcast.lane.b32.xlu0 %v454, %s459
    %v461 = vpop.permute.xlu0 %460
    %v462 = vlaneseq
    %v463 = vshrl.u32 %v462, 7
    %v464 = vsub.s32 3, %v463
    %v465 = vrot.slane %v428, %v464
    %467 = vbcast.lane.b32.xlu0 %v465, 256
    %v468 = vpop.permute.xlu0 %467
    %s470 = sor.u32 256, 8
    %471 = vbcast.lane.b32.xlu0 %v465, %s470
    %v472 = vpop.permute.xlu0 %471
    %v473 = vlaneseq
    %v474 = vshrl.u32 %v473, 7
    %v475 = vsub.s32 4, %v474
    %v476 = vrot.slane %v428, %v475
    %478 = vbcast.lane.b32.xlu0 %v476, 256
    %v479 = vpop.permute.xlu0 %478
    %s481 = sor.u32 256, 8
    %482 = vbcast.lane.b32.xlu0 %v476, %s481
    %v483 = vpop.permute.xlu0 %482
    %v484 = vlaneseq
    %v485 = vshrl.u32 %v484, 7
    %v486 = vsub.s32 5, %v485
    %v487 = vrot.slane %v428, %v486
    %489 = vbcast.lane.b32.xlu0 %v487, 256
    %v490 = vpop.permute.xlu0 %489
    %s492 = sor.u32 256, 8
    %493 = vbcast.lane.b32.xlu0 %v487, %s492
    %v494 = vpop.permute.xlu0 %493
    %v495 = vlaneseq
    %v496 = vshrl.u32 %v495, 7
    %v497 = vsub.s32 6, %v496
    %v498 = vrot.slane %v428, %v497
    %500 = vbcast.lane.b32.xlu0 %v498, 256
    %v501 = vpop.permute.xlu0 %500
    %s503 = sor.u32 256, 8
    %504 = vbcast.lane.b32.xlu0 %v498, %s503
    %v505 = vpop.permute.xlu0 %504
    %v506 = vlaneseq
    %v507 = vshrl.u32 %v506, 7
    %v508 = vsub.s32 7, %v507
    %v509 = vrot.slane %v428, %v508
    %511 = vbcast.lane.b32.xlu0 %v509, 256
    %v512 = vpop.permute.xlu0 %511
    %s514 = sor.u32 256, 8
    %515 = vbcast.lane.b32.xlu0 %v509, %s514
    %v516 = vpop.permute.xlu0 %515
    %v517 = vmul.f32 %v83, %v435
    %v518 = vmul.f32 %v84, %v439
    %v519 = vmul.f32 %v85, %v446
    %v520 = vmul.f32 %v86, %v450
    %v521 = vmul.f32 %v87, %v457
    %v522 = vmul.f32 %v88, %v461
    %v523 = vmul.f32 %v89, %v468
    %v524 = vmul.f32 %v90, %v472
    %v525 = vmul.f32 %v91, %v479
    %v526 = vmul.f32 %v92, %v483
    %v527 = vmul.f32 %v93, %v490
    %v528 = vmul.f32 %v94, %v494
    %v529 = vmul.f32 %v95, %v501
    %v530 = vmul.f32 %v96, %v505
    %v531 = vmul.f32 %v97, %v512
    %v532 = vmul.f32 %v98, %v516
    %533 = vst [vmem:[#allocation11] sm:$0xff] %v517
    %534 = vst [vmem:[#allocation11 + $0x8] sm:$0xff] %v518
    %535 = vst [vmem:[#allocation11 + $0x10] sm:$0xff] %v519
    %536 = vst [vmem:[#allocation11 + $0x18] sm:$0xff] %v520
    %537 = vst [vmem:[#allocation11 + $0x20] sm:$0xff] %v521
    %538 = vst [vmem:[#allocation11 + $0x28] sm:$0xff] %v522
    %539 = vst [vmem:[#allocation11 + $0x30] sm:$0xff] %v523
    %540 = vst [vmem:[#allocation11 + $0x38] sm:$0xff] %v524
    %541 = vst [vmem:[#allocation11 + $0x40] sm:$0xff] %v525
    %542 = vst [vmem:[#allocation11 + $0x48] sm:$0xff] %v526
    %543 = vst [vmem:[#allocation11 + $0x50] sm:$0xff] %v527
    %544 = vst [vmem:[#allocation11 + $0x58] sm:$0xff] %v528
    %545 = vst [vmem:[#allocation11 + $0x60] sm:$0xff] %v529
    %546 = vst [vmem:[#allocation11 + $0x68] sm:$0xff] %v530
    %547 = vst [vmem:[#allocation11 + $0x70] sm:$0xff] %v531
    %548 = vst [vmem:[#allocation11 + $0x78] sm:$0xff] %v532
    // Predicated region
    $region42: #{tpu_custom_call.1} parent=1 // pred_check
      _
    $region43: #{tpu_custom_call.1} parent=1 // pred_check_branch
      %550 = sbr.rel (0) target = $region45
    $region44: #{tpu_custom_call.1} parent=1 // pred_region
      %s552 = ssub.s32 2048, 2048
      %553 = vsyncadd [#allocation4], %s552
      %s554 = sshll.u32 [#allocation11], 4
      %s555 = int_to_ptr.vmem [resolvable:$true] %s554
      %560 = dma.vmem_to_hbm [thread:$0]  %s555, 2048, %s5, [#allocation4], 128, 128, 8
    $region45: #{tpu_custom_call.1} parent=1 // pred_fallthru
      _
    // Predicated region
    $region46: #{tpu_custom_call.1} parent=1 // pred_check
      _
    $region47: #{tpu_custom_call.1} parent=1 // pred_check_branch
      %562 = sbr.rel (0) target = $region49
    $region48: #{tpu_custom_call.1} parent=1 // pred_region
      %563 = dma.done [#allocation4], 2048
    $region49: #{tpu_custom_call.1} parent=1 // pred_fallthru
      _
    %564 = vsyncpa [#allocation3], 1
    %565 = vsyncpa [#allocation6], 1
    %566 = vsyncpa [#allocation9], 1
    %567 = vsyncpa [#allocation4], 1

</llo_original>
